<compile_context>
chip_gen: v7x
topology: tpu7x:2x2x1
jax: 0.10.0
libtpu: 0.0.40
codegen_flags: <defaults>
</compile_context>

<pallas_src>
import math

import jax
import jax.numpy as jnp
import numpy as np
from jax.experimental import pallas as pl
from jax.experimental.pallas import tpu as pltpu

_ALIGN = 16  # bf16 sublane packing (multiple of the f32 sublane tile of 8)


# --------------------------------------------------------------------------- #
# Kernel
# --------------------------------------------------------------------------- #
def _data_embedding_kernel(xf_ref, gnorm_ref, e12_ref, bse_ref, kfold_ref,
                           mctx_ref, mtok_ref, bias_ref, o_ref):
    """One (Bt, W*C) batch-row slab per grid step.

    xf_ref   : (Bt, W*C)    bf16   lane-flattened input rows
    gnorm_ref: (W*C, W*C)   f32    P @ P.T (block-diag ones): row-norm broadcast
    e12_ref  : (W*C, 2*Kp)  bf16   [E1 | E2] Gram lane expansion (Kp % 128 == 0)
    bse_ref  : (1, W*C)     f32    seW bias, repeated per channel
    kfold_ref: (Kp, W*C)    bf16   Psum @ Kse (Gram reduction + seW + transpose)
    mctx_ref : (W*C, W*C)   bf16   ContextConv as block-tridiagonal matrix
    mtok_ref : (W*C, W*D)   bf16   tokenConv as block-circulant matrix
    bias_ref : (1, W*D)     f32    bctx @ Mtok + positional encoding
    o_ref    : (Bt, W*D)    f32    lane-flattened output
    """
    f32, bf16 = jnp.float32, jnp.bfloat16
    kp = kfold_ref.shape[0]

    xf_lo = xf_ref[...]                                   # (Bt, WC) bf16
    xf = xf_lo.astype(f32)

    # Per-time-row L2 norm.  Squares + rsqrt stay in f32 (VPU/EUP); no eps,
    # matching torch.norm + divide (an all-zero time row -> NaN in both paths).
    sq = jnp.dot(xf * xf, gnorm_ref[...], preferred_element_type=f32)
    xn = (xf * jax.lax.rsqrt(sq)).astype(bf16)            # (Bt, WC)

    # Gram lane expansion: one wide dot, then a free vreg-aligned lane split.
    uu = jnp.dot(xn, e12_ref[...], preferred_element_type=f32)   # (Bt, 2*Kp)
    u = (uu[:, :kp] * uu[:, kp:]).astype(bf16)                   # (Bt, Kp)

    # structure_embedding: Gram time-reduction + seW + ReLU + transpose(2,1),
    # all folded into one matmul.
    se = jnp.maximum(
        jnp.dot(u, kfold_ref[...], preferred_element_type=f32) + bse_ref[...],
        0.0)                                              # (Bt, WC)

    # ContextConv (k=3, zero pad) as one block-tridiagonal matmul; its bias is
    # folded into bias_ref on the output side.
    h = (jnp.dot(xf_lo, mctx_ref[...], preferred_element_type=f32)
         + se).astype(bf16)                               # (Bt, WC)

    # tokenConv (k=3, circular, no bias) as one block-circulant matmul, plus
    # the folded (ContextConv bias @ Mtok + positional encoding) output bias.
    # Dropout p=0.0 -> identity.  Store is lane-dense (W*D % 128 == 0).
    o_ref[...] = (jnp.dot(h, mtok_ref[...], preferred_element_type=f32)
                  + bias_ref[...])


# --------------------------------------------------------------------------- #
# Host-side weight folding (numpy, float64 so it can be validated exactly)
# --------------------------------------------------------------------------- #
def build_folded(wctx, bctx, wse, bse, wtok, pe):
    """Fold the module weights into the structured matrices the kernel uses.

    wctx : (C, C, 3)  ContextConv weight, torch Conv1d layout (out, in, tap)
    bctx : (C,)       ContextConv bias
    wse  : (W, C)     seW weight (Linear c_in -> input_window)
    bse  : (W,)       seW bias
    wtok : (D, C, 3)  tokenConv weight, torch Conv1d layout (out, in, tap)
    pe   : (W, D)     positional encoding (first W rows)
    """
    wctx = np.asarray(wctx, np.float64)
    bctx = np.asarray(bctx, np.float64)
    wse = np.asarray(wse, np.float64)
    bse = np.asarray(bse, np.float64)
    wtok = np.asarray(wtok, np.float64)
    pe = np.asarray(pe, np.float64)

    C = wctx.shape[0]
    D = wtok.shape[0]
    W = wse.shape[0]
    WC, CC, WD = W * C, C * C, W * D
    kraw = W * CC
    kp = -(-kraw // 128) * 128          # pad so the in-kernel split is vreg-aligned

    # P @ P.T fold: per-time-row sum-of-squares broadcast (block-diag ones).
    gnorm = np.kron(np.eye(W), np.ones((C, C)))

    # Gram lane expansion, E1 || E2 concatenated on the lane axis:
    #   uu[b, v*CC+i*C+j]      = xn[b, v, i]
    #   uu[b, kp + v*CC+i*C+j] = xn[b, v, j]
    e12 = np.zeros((WC, 2 * kp))
    for v in range(W):
        for i in range(C):
            for j in range(C):
                e12[v * C + i, v * CC + i * C + j] = 1.0
                e12[v * C + j, kp + v * CC + i * C + j] = 1.0

    # Psum @ Kse fold: time-summed Gram straight into seW (+ final transpose):
    #   se_flat[b, w*C+i] = relu(sum_{v,j} xn[b,v,i]*xn[b,v,j]*wse[w,j] + bse[w])
    kse = np.zeros((CC, WC))
    for w in range(W):
        for i in range(C):
            for j in range(C):
                kse[i * C + j, w * C + i] = wse[w, j]
    kfold = np.zeros((kp, WC))
    kfold[:kraw] = np.tile(kse, (W, 1))
    bse_flat = np.repeat(bse, C)[None, :]                 # (1, W*C)

    # ContextConv (zero padding) as a block-tridiagonal matrix.
    mctx = np.zeros((WC, WC))
    for w in range(W):
        for t in range(3):
            v = w + t - 1
            if 0 <= v < W:
                mctx[v * C:(v + 1) * C, w * C:(w + 1) * C] += wctx[:, :, t].T

    # tokenConv (circular padding) as a block-circulant matrix.
    mtok = np.zeros((WC, WD))
    for w in range(W):
        for t in range(3):
            v = (w + t - 1) % W
            mtok[v * C:(v + 1) * C, w * D:(w + 1) * D] += wtok[:, :, t].T

    # ContextConv bias pushed through mtok and merged with the positional
    # encoding:  out = (x @ mctx + se) @ mtok + bias_out   (exact identity).
    bctx_flat = np.tile(bctx, W)[None, :]
    bias_out = bctx_flat @ mtok + pe.reshape(1, WD)

    return dict(gnorm=gnorm, e12=e12, bse=bse_flat, kfold=kfold,
                mctx=mctx, mtok=mtok, bias_out=bias_out)


def device_params(folded):
    """Cast the folded matrices to the kernel dtypes (bf16 MXU operands,
    f32 for biases and the normalization matrix)."""
    bf, f32 = jnp.bfloat16, jnp.float32
    return (jnp.asarray(folded["gnorm"], f32),
            jnp.asarray(folded["e12"], bf),
            jnp.asarray(folded["bse"], f32),
            jnp.asarray(folded["kfold"], bf),
            jnp.asarray(folded["mctx"], bf),
            jnp.asarray(folded["mtok"], bf),
            jnp.asarray(folded["bias_out"], f32))


# --------------------------------------------------------------------------- #
# Batch-tile sizing
# --------------------------------------------------------------------------- #
def _round_up(n, m):
    return -(-n // m) * m


def _vmem_budget_bytes():
    try:
        cap = int(pltpu.get_tpu_info().vmem_capacity_bytes)
    except Exception:  # pragma: no cover - conservative fallback off-TPU
        cap = 64 << 20
    # Stay well below every generation's default scoped-VMEM limit
    # (16 MiB v5e / 32 MiB v6e+v7x): v5e/v6e (128 MiB physical) get a 16 MiB
    # tile budget, v7x (64 MiB physical) gets 8 MiB -> ~half the tile.
    return max(4 << 20, min(cap // 8, 16 << 20))


def _pick_batch_block(n_rows, per_row_bytes, weight_bytes):
    """Return (Bt, padded_rows): Bt a multiple of 16, rows padded to nb*Bt."""
    budget = max(1 << 20, _vmem_budget_bytes() - weight_bytes)
    cap = max(_ALIGN, min(512, (budget // per_row_bytes) // _ALIGN * _ALIGN))
    rows = _round_up(n_rows, _ALIGN)
    if rows <= cap:
        if rows >= 256:
            # Two balanced "parallel" steps so both v7x TensorCores get >= 128
            # rows; costs one extra ~0.35us step on single-TC v5e/v6e.
            bt = _round_up(rows // 2, _ALIGN)
            return bt, 2 * bt
        return rows, rows            # one full-batch step (best on v5e/v6e)
    return cap, _round_up(rows, cap)


# --------------------------------------------------------------------------- #
# Wrapper
# --------------------------------------------------------------------------- #
def data_embedding(x, params, *, d_model):
    """DataEmbedding forward: (B, W, C) -> (B, W, d_model)."""
    B, W, C = x.shape
    D = d_model
    WC, WD = W * C, W * D
    kp2 = params[1].shape[1]                              # 2 * padded Gram width

    # Rough per-row VMEM footprint: double-buffered I/O blocks + the widest
    # f32/bf16 intermediates of the kernel body.
    per_row = (2 * 2 * WC            # bf16 input block, double-buffered
               + 2 * 4 * WD          # f32 output block, double-buffered
               + 4 * kp2             # uu (f32)
               + kp2                 # u (bf16)
               + 6 * 4 * WC          # f32 row intermediates (xf, sq, se, ...)
               + 4 * WD)             # matmul result before store
    weight_bytes = 2 * sum(int(np.prod(a.shape)) * a.dtype.itemsize
                           for a in params)
    Bt, Bpad = _pick_batch_block(B, per_row, weight_bytes)
    nb = Bpad // Bt

    # Lane-flatten and cast to bf16 outside the kernel (halves input DMA).
    xf = x.reshape(B, WC).astype(jnp.bfloat16)
    if Bpad > B:
        # Pad with ones so padded rows don't hit rsqrt(0); every row is an
        # independent computation, and the padding is sliced off below.
        xf = jnp.concatenate(
            [xf, jnp.ones((Bpad - B, WC), jnp.bfloat16)], axis=0)

    def const_spec(a):
        # Grid-invariant block index -> weights are DMA'd once, never refetched.
        return pl.BlockSpec(a.shape, lambda b, _z=(0,) * a.ndim: _z)

    out = pl.pallas_call(
        _data_embedding_kernel,
        out_shape=jax.ShapeDtypeStruct((Bpad, WD), jnp.float32),
        grid=(nb,),
        in_specs=[pl.BlockSpec((Bt, WC), lambda b: (b, 0))]
                 + [const_spec(a) for a in params],
        out_specs=pl.BlockSpec((Bt, WD), lambda b: (b, 0)),
        compiler_params=pltpu.CompilerParams(
            dimension_semantics=("parallel",)),
    )(xf, *params)
    return out[:B].reshape(B, W, D)


# --------------------------------------------------------------------------- #
# References (numpy float64) for validation
# --------------------------------------------------------------------------- #
def positional_encoding(W, D):
    position = np.arange(W, dtype=np.float64)[:, None]
    div_term = np.exp(np.arange(0, D, 2, dtype=np.float64)
                      * (-math.log(10000.0) / D))
    pe = np.zeros((W, D))
    pe[:, 0::2] = np.sin(position * div_term)
    pe[:, 1::2] = np.cos(position * div_term)
    return pe


def reference_np(x, wctx, bctx, wse, bse, wtok, pe):
    """Dense float64 reference using the original (unfolded) weights."""
    x = np.asarray(x, np.float64)
    B, W, C = x.shape
    D = wtok.shape[0]
    # ContextConv: Conv1d(C->C, k=3, zero padding, bias)
    xp = np.pad(x, ((0, 0), (1, 1), (0, 0)))
    ctx = np.zeros((B, W, C))
    for t in range(3):
        ctx += xp[:, t:t + W, :] @ np.asarray(wctx, np.float64)[:, :, t].T
    ctx += np.asarray(bctx, np.float64)
    # structure_embedding
    xn = x / np.linalg.norm(x, axis=-1, keepdims=True)
    gram = np.einsum('bwi,bwj->bij', xn, xn)
    se = np.maximum(np.einsum('bij,wj->biw', gram, np.asarray(wse, np.float64))
                    + np.asarray(bse, np.float64), 0.0)           # (B, C, W)
    h = ctx + np.transpose(se, (0, 2, 1))
    # tokenConv: Conv1d(C->D, k=3, circular padding, no bias)
    hp = np.concatenate([h[:, -1:, :], h, h[:, :1, :]], axis=1)
    tok = np.zeros((B, W, D))
    for t in range(3):
        tok += hp[:, t:t + W, :] @ np.asarray(wtok, np.float64)[:, :, t].T
    return tok + np.asarray(pe, np.float64)[None, :W, :]


def folded_reference_np(x, folded):
    """Float64 mirror of the kernel math using the folded matrices (validates
    the host-side folding exactly, independent of bf16/MXU rounding)."""
    x = np.asarray(x, np.float64)
    B, W, C = x.shape
    kp = folded["kfold"].shape[0]
    xf = x.reshape(B, W * C)
    sq = (xf * xf) @ folded["gnorm"]
    xn = xf / np.sqrt(sq)
    uu = xn @ folded["e12"]
    u = uu[:, :kp] * uu[:, kp:]
    se = np.maximum(u @ folded["kfold"] + folded["bse"], 0.0)
    h = xf @ folded["mctx"] + se
    out = h @ folded["mtok"] + folded["bias_out"]
    D = folded["mtok"].shape[1] // W
    return out.reshape(B, W, D)


# --------------------------------------------------------------------------- #
if __name__ == "__main__":
    B, W, C, D = 2, 8, 4, 32   # batch, input_window (= seq len), c_in, d_model

    key = jax.random.PRNGKey(0)
    k1, k2, k3, k4, k5, k6 = jax.random.split(key, 6)

    x = jax.random.normal(k1, (B, W, C), jnp.float32)

    # ContextConv: weight (C_out, C_in, 3) kaiming-normal-ish, bias (C,)
    gain = math.sqrt(2.0 / (1.0 + 0.01 ** 2))
    std_conv = gain / math.sqrt(C * 3)
    wctx = np.asarray(jax.random.normal(k2, (C, C, 3), jnp.float32)) * std_conv
    bctx = np.asarray(jax.random.uniform(
        k3, (C,), jnp.float32, -1.0 / math.sqrt(C * 3), 1.0 / math.sqrt(C * 3)))
    # seW: Linear(c_in -> input_window)
    wse = np.asarray(jax.random.uniform(
        k4, (W, C), jnp.float32, -1.0 / math.sqrt(C), 1.0 / math.sqrt(C)))
    bse = np.asarray(jax.random.uniform(
        k5, (W,), jnp.float32, -1.0 / math.sqrt(C), 1.0 / math.sqrt(C)))
    # tokenConv: weight (d_model, c_in, 3), no bias
    wtok = np.asarray(jax.random.normal(k6, (D, C, 3), jnp.float32)) * std_conv

    pe = positional_encoding(W, D)
    folded = build_folded(wctx, bctx, wse, bse, wtok, pe)

    # (1) Exact float64 validation of the host-side folding against the dense
    #     reference (catches construction bugs independent of bf16 rounding).
    x_np = np.asarray(x, np.float64)
    ref = reference_np(x_np, wctx, bctx, wse, bse, wtok, pe)
    np.testing.assert_allclose(folded_reference_np(x_np, folded), ref,
                               rtol=1e-9, atol=1e-9)

    # (2) Kernel run.  bf16 MXU operands (f32 accumulation) + EUP rsqrt, so the
    #     end-to-end check uses a bf16-appropriate tolerance; fold correctness
    #     is already verified exactly above.
    params = device_params(folded)
    out = jax.block_until_ready(data_embedding(x, params, d_model=D))
    assert out.shape == (B, W, D), out.shape
    np.testing.assert_allclose(np.asarray(out, np.float64), ref,
                               rtol=5e-2, atol=5e-2)

    print("KERNEL_OK")
</pallas_src>

<mosaic_0001>
module attributes {stable_mosaic.version = 11 : i64} {
  func.func @_data_embedding_kernel(%arg0: i32, %arg1: memref<16x32xbf16, #tpu.memory_space<vmem>>, %arg2: memref<32x32xf32, #tpu.memory_space<vmem>>, %arg3: memref<32x256xbf16, #tpu.memory_space<vmem>>, %arg4: memref<1x32xf32, #tpu.memory_space<vmem>>, %arg5: memref<128x32xbf16, #tpu.memory_space<vmem>>, %arg6: memref<32x32xbf16, #tpu.memory_space<vmem>>, %arg7: memref<32x256xbf16, #tpu.memory_space<vmem>>, %arg8: memref<1x256xf32, #tpu.memory_space<vmem>>, %arg9: memref<16x256xf32, #tpu.memory_space<vmem>>) attributes {dimension_semantics = [#tpu.dimension_semantics<parallel>], iteration_bounds = array<i64: 1>, scalar_prefetch = 0 : i64, scratch_operands = 0 : i64, tpu.core_type = #tpu.core_type<tc>, window_params = [{transform_indices = @transform_0, window_bounds = array<i64: 16, 32>}, {pipeline_mode = #tpu.pipeline_mode<synchronous>, transform_indices = @transform_1, window_bounds = array<i64: 32, 32>}, {pipeline_mode = #tpu.pipeline_mode<synchronous>, transform_indices = @transform_2, window_bounds = array<i64: 32, 256>}, {pipeline_mode = #tpu.pipeline_mode<synchronous>, transform_indices = @transform_3, window_bounds = array<i64: 1, 32>}, {pipeline_mode = #tpu.pipeline_mode<synchronous>, transform_indices = @transform_4, window_bounds = array<i64: 128, 32>}, {pipeline_mode = #tpu.pipeline_mode<synchronous>, transform_indices = @transform_5, window_bounds = array<i64: 32, 32>}, {pipeline_mode = #tpu.pipeline_mode<synchronous>, transform_indices = @transform_6, window_bounds = array<i64: 32, 256>}, {pipeline_mode = #tpu.pipeline_mode<synchronous>, transform_indices = @transform_7, window_bounds = array<i64: 1, 256>}, {transform_indices = @transform_8, window_bounds = array<i64: 16, 256>}]} {
    %c0 = arith.constant 0 : index
    %c0_0 = arith.constant 0 : index
    %0 = vector.load %arg1[%c0, %c0_0] : memref<16x32xbf16, #tpu.memory_space<vmem>>, vector<16x32xbf16>
    %1 = arith.extf %0 : vector<16x32xbf16> to vector<16x32xf32>
    %2 = arith.mulf %1, %1 : vector<16x32xf32>
    %c0_1 = arith.constant 0 : index
    %c0_2 = arith.constant 0 : index
    %3 = vector.load %arg2[%c0_1, %c0_2] : memref<32x32xf32, #tpu.memory_space<vmem>>, vector<32x32xf32>
    %cst = arith.constant dense<0.000000e+00> : vector<16x32xf32>
    %4 = tpu.matmul %2, %3, %cst {dimension_numbers = #tpu.dot_dimension_numbers<[1], [0], [0], [1], [0, 0, 1, 1], [], []>} : vector<16x32xf32>, vector<32x32xf32>, vector<16x32xf32> -> vector<16x32xf32>
    %5 = math.rsqrt %4 : vector<16x32xf32>
    %6 = arith.mulf %1, %5 : vector<16x32xf32>
    %7 = arith.truncf %6 : vector<16x32xf32> to vector<16x32xbf16>
    %c0_3 = arith.constant 0 : index
    %c0_4 = arith.constant 0 : index
    %8 = vector.load %arg3[%c0_3, %c0_4] : memref<32x256xbf16, #tpu.memory_space<vmem>>, vector<32x256xbf16>
    %cst_5 = arith.constant dense<0.000000e+00> : vector<16x256xf32>
    %9 = tpu.matmul %7, %8, %cst_5 {dimension_numbers = #tpu.dot_dimension_numbers<[1], [0], [0], [1], [0, 0, 1, 1], [], []>} : vector<16x32xbf16>, vector<32x256xbf16>, vector<16x256xf32> -> vector<16x256xf32>
    %10 = vector.extract_strided_slice %9 {offsets = [0, 0], sizes = [16, 128], strides = [1, 1]} : vector<16x256xf32> to vector<16x128xf32>
    %11 = vector.extract_strided_slice %9 {offsets = [0, 128], sizes = [16, 128], strides = [1, 1]} : vector<16x256xf32> to vector<16x128xf32>
    %12 = arith.mulf %10, %11 : vector<16x128xf32>
    %13 = arith.truncf %12 : vector<16x128xf32> to vector<16x128xbf16>
    %c0_6 = arith.constant 0 : index
    %c0_7 = arith.constant 0 : index
    %14 = vector.load %arg5[%c0_6, %c0_7] : memref<128x32xbf16, #tpu.memory_space<vmem>>, vector<128x32xbf16>
    %cst_8 = arith.constant dense<0.000000e+00> : vector<16x32xf32>
    %15 = tpu.matmul %13, %14, %cst_8 {dimension_numbers = #tpu.dot_dimension_numbers<[1], [0], [0], [1], [0, 0, 1, 1], [], []>} : vector<16x128xbf16>, vector<128x32xbf16>, vector<16x32xf32> -> vector<16x32xf32>
    %c0_9 = arith.constant 0 : index
    %c0_10 = arith.constant 0 : index
    %16 = vector.load %arg4[%c0_9, %c0_10] : memref<1x32xf32, #tpu.memory_space<vmem>>, vector<1x32xf32>
    %17 = vector.broadcast %16 : vector<1x32xf32> to vector<16x32xf32>
    %18 = arith.addf %15, %17 : vector<16x32xf32>
    %cst_11 = arith.constant 0.000000e+00 : f32
    %19 = vector.broadcast %cst_11 : f32 to vector<16x32xf32>
    %20 = arith.maximumf %18, %19 : vector<16x32xf32>
    %c0_12 = arith.constant 0 : index
    %c0_13 = arith.constant 0 : index
    %21 = vector.load %arg6[%c0_12, %c0_13] : memref<32x32xbf16, #tpu.memory_space<vmem>>, vector<32x32xbf16>
    %cst_14 = arith.constant dense<0.000000e+00> : vector<16x32xf32>
    %22 = tpu.matmul %0, %21, %cst_14 {dimension_numbers = #tpu.dot_dimension_numbers<[1], [0], [0], [1], [0, 0, 1, 1], [], []>} : vector<16x32xbf16>, vector<32x32xbf16>, vector<16x32xf32> -> vector<16x32xf32>
    %23 = arith.addf %22, %20 : vector<16x32xf32>
    %24 = arith.truncf %23 : vector<16x32xf32> to vector<16x32xbf16>
    %c0_15 = arith.constant 0 : index
    %c0_16 = arith.constant 0 : index
    %25 = vector.load %arg7[%c0_15, %c0_16] : memref<32x256xbf16, #tpu.memory_space<vmem>>, vector<32x256xbf16>
    %cst_17 = arith.constant dense<0.000000e+00> : vector<16x256xf32>
    %26 = tpu.matmul %24, %25, %cst_17 {dimension_numbers = #tpu.dot_dimension_numbers<[1], [0], [0], [1], [0, 0, 1, 1], [], []>} : vector<16x32xbf16>, vector<32x256xbf16>, vector<16x256xf32> -> vector<16x256xf32>
    %c0_18 = arith.constant 0 : index
    %c0_19 = arith.constant 0 : index
    %27 = vector.load %arg8[%c0_18, %c0_19] : memref<1x256xf32, #tpu.memory_space<vmem>>, vector<1x256xf32>
    %28 = vector.broadcast %27 : vector<1x256xf32> to vector<16x256xf32>
    %29 = arith.addf %26, %28 : vector<16x256xf32>
    %c0_20 = arith.constant 0 : index
    %c0_21 = arith.constant 0 : index
    %30 = vector.load %arg9[%c0_20, %c0_21] : memref<16x256xf32, #tpu.memory_space<vmem>>, vector<16x256xf32>
    tpu.vector_store %arg9[%c0_20, %c0_21], %29 {strides = array<i32>} : memref<16x256xf32, #tpu.memory_space<vmem>>, vector<16x256xf32>,
    return
  }
  func.func @transform_0(%arg0: i32) -> (i32, i32) {
    %c0_i32 = arith.constant 0 : i32
    %c0_i32_0 = arith.constant 0 : i32
    return %arg0, %c0_i32 : i32, i32
  }
  func.func @transform_1(%arg0: i32) -> (i32, i32) {
    %c0_i32 = arith.constant 0 : i32
    %c0_i32_0 = arith.constant 0 : i32
    %c0_i32_1 = arith.constant 0 : i32
    return %c0_i32, %c0_i32_0 : i32, i32
  }
  func.func @transform_2(%arg0: i32) -> (i32, i32) {
    %c0_i32 = arith.constant 0 : i32
    %c0_i32_0 = arith.constant 0 : i32
    %c0_i32_1 = arith.constant 0 : i32
    return %c0_i32, %c0_i32_0 : i32, i32
  }
  func.func @transform_3(%arg0: i32) -> (i32, i32) {
    %c0_i32 = arith.constant 0 : i32
    %c0_i32_0 = arith.constant 0 : i32
    %c0_i32_1 = arith.constant 0 : i32
    return %c0_i32, %c0_i32_0 : i32, i32
  }
  func.func @transform_4(%arg0: i32) -> (i32, i32) {
    %c0_i32 = arith.constant 0 : i32
    %c0_i32_0 = arith.constant 0 : i32
    %c0_i32_1 = arith.constant 0 : i32
    return %c0_i32, %c0_i32_0 : i32, i32
  }
  func.func @transform_5(%arg0: i32) -> (i32, i32) {
    %c0_i32 = arith.constant 0 : i32
    %c0_i32_0 = arith.constant 0 : i32
    %c0_i32_1 = arith.constant 0 : i32
    return %c0_i32, %c0_i32_0 : i32, i32
  }
  func.func @transform_6(%arg0: i32) -> (i32, i32) {
    %c0_i32 = arith.constant 0 : i32
    %c0_i32_0 = arith.constant 0 : i32
    %c0_i32_1 = arith.constant 0 : i32
    return %c0_i32, %c0_i32_0 : i32, i32
  }
  func.func @transform_7(%arg0: i32) -> (i32, i32) {
    %c0_i32 = arith.constant 0 : i32
    %c0_i32_0 = arith.constant 0 : i32
    %c0_i32_1 = arith.constant 0 : i32
    return %c0_i32, %c0_i32_0 : i32, i32
  }
  func.func @transform_8(%arg0: i32) -> (i32, i32) {
    %c0_i32 = arith.constant 0 : i32
    %c0_i32_0 = arith.constant 0 : i32
    return %arg0, %c0_i32 : i32, i32
  }
}

</mosaic_0001>

<llo_original>
// kernel: tpu_custom_call.1
$region0: #{tpu_custom_call.1}
  #allocation0 [shape = 'u32[]', space=smem, size = 0x4, offset = 0x4, fixed_abs, tag = 'smem constant byte address 0x4 - core index']
  #allocation1 [shape = 'u32[144,128]{1,0:T(1,128)}', space=vmem, size = 0x12000, scoped, tag = 'internal scratch']
  %s0 = inlined_call_operand.hbm [shape: bf16[16,32], index: 0, kind: input, shape index: {}]
  %s1 = inlined_call_operand.vmem [shape: f32[32,32], index: 1, kind: input, shape index: {}]
  %s2 = inlined_call_operand.vmem [shape: bf16[32,256], index: 2, kind: input, shape index: {}]
  %s3 = inlined_call_operand.hbm [shape: f32[1,32], index: 3, kind: input, shape index: {}]
  %s4 = inlined_call_operand.vmem [shape: bf16[128,32], index: 4, kind: input, shape index: {}]
  %s5 = inlined_call_operand.hbm [shape: bf16[32,32], index: 5, kind: input, shape index: {}]
  %s6 = inlined_call_operand.vmem [shape: bf16[32,256], index: 6, kind: input, shape index: {}]
  %s7 = inlined_call_operand.vmem [shape: f32[1,256], index: 7, kind: input, shape index: {}]
  %s8 = inlined_call_operand.hbm [shape: f32[16,256], index: 8, kind: output, shape index: {}]
  %s9 = sld [smem:[#allocation0]]
  $region54: #{tpu_custom_call.1} parent=0
    _
  %s11 = ssub.s32 1, %s9
  %s12 = scalar_select 0, %s11, %s9
  $region1: #{tpu_custom_call.1} parent=0
    #allocation2 [shape = 'u8[4096]{0}', space=vmem, size = 0x1000, scoped, tag = 'input window, operand 0, single buffered']
    #allocation3 [shape = 's32[1]{0}', space=sflag, size = 0x4, scoped, tag = 'scoped memory for tpu_custom_call.1']
    #allocation4 [shape = 's32[1]{0}', space=sflag, size = 0x4, scoped, tag = 'scoped memory for tpu_custom_call.1']
    #allocation5 [shape = 'u8[512]{0}', space=vmem, size = 0x400, scoped, tag = 'input window, operand 3, single buffered']
    #allocation6 [shape = 's32[1]{0}', space=sflag, size = 0x4, scoped, tag = 'scoped memory for tpu_custom_call.1']
    #allocation7 [shape = 'u8[8192]{0}', space=vmem, size = 0x2000, scoped, tag = 'input window, operand 5, single buffered']
    #allocation8 [shape = 'u8[16384]{0}', space=vmem, size = 0x4000, scoped, tag = 'output window, operand 0, single buffered']
    %13 = vsyncpa [#allocation3], 0
    %14 = vsyncpa [#allocation6], 0
    %15 = vsyncpa [#allocation4], 0
    // Predicated region
    $region2: #{tpu_custom_call.1} parent=1 // pred_check
      _
    $region3: #{tpu_custom_call.1} parent=1 // pred_check_branch
      %17 = sbr.rel (0) target = $region5
    $region4: #{tpu_custom_call.1} parent=1 // pred_region
      %s19 = ssub.s32 128, 128
      %20 = vsyncadd [#allocation3], %s19
      %s21 = sshll.u32 [#allocation2], 4
      %s22 = int_to_ptr.vmem [resolvable:$true] %s21
      %27 = dma.hbm_to_vmem [thread:$0]  %s0, 128, %s22, [#allocation3], 64, 64, 4
    $region5: #{tpu_custom_call.1} parent=1 // pred_fallthru
      _
    // Predicated region
    $region6: #{tpu_custom_call.1} parent=1 // pred_check
      _
    $region7: #{tpu_custom_call.1} parent=1 // pred_check_branch
      %29 = sbr.rel (0) target = $region9
    $region8: #{tpu_custom_call.1} parent=1 // pred_region
      _
    $region9: #{tpu_custom_call.1} parent=1 // pred_fallthru
      _
    // Predicated region
    $region10: #{tpu_custom_call.1} parent=1 // pred_check
      _
    $region11: #{tpu_custom_call.1} parent=1 // pred_check_branch
      %31 = sbr.rel (0) target = $region13
    $region12: #{tpu_custom_call.1} parent=1 // pred_region
      _
    $region13: #{tpu_custom_call.1} parent=1 // pred_fallthru
      _
    // Predicated region
    $region14: #{tpu_custom_call.1} parent=1 // pred_check
      _
    $region15: #{tpu_custom_call.1} parent=1 // pred_check_branch
      %33 = sbr.rel (0) target = $region17
    $region16: #{tpu_custom_call.1} parent=1 // pred_region
      %s35 = ssub.s32 16, 16
      %36 = vsyncadd [#allocation6], %s35
      %s38 = sshll.u32 [#allocation5], 4
      %s39 = int_to_ptr.vmem [resolvable:$true] %s38
      %41 = dma.hbm_to_vmem [thread:$0]  %s3, 16, %s39, [#allocation6]
    $region17: #{tpu_custom_call.1} parent=1 // pred_fallthru
      _
    // Predicated region
    $region18: #{tpu_custom_call.1} parent=1 // pred_check
      _
    $region19: #{tpu_custom_call.1} parent=1 // pred_check_branch
      %43 = sbr.rel (0) target = $region21
    $region20: #{tpu_custom_call.1} parent=1 // pred_region
      _
    $region21: #{tpu_custom_call.1} parent=1 // pred_fallthru
      _
    // Predicated region
    $region22: #{tpu_custom_call.1} parent=1 // pred_check
      _
    $region23: #{tpu_custom_call.1} parent=1 // pred_check_branch
      %45 = sbr.rel (0) target = $region25
    $region24: #{tpu_custom_call.1} parent=1 // pred_region
      %s47 = ssub.s32 256, 256
      %48 = vsyncadd [#allocation6], %s47
      %s49 = sshll.u32 [#allocation7], 4
      %s50 = int_to_ptr.vmem [resolvable:$true] %s49
      %55 = dma.hbm_to_vmem [thread:$0]  %s5, 256, %s50, [#allocation6], 64, 64, 4
    $region25: #{tpu_custom_call.1} parent=1 // pred_fallthru
      _
    // Predicated region
    $region26: #{tpu_custom_call.1} parent=1 // pred_check
      _
    $region27: #{tpu_custom_call.1} parent=1 // pred_check_branch
      %57 = sbr.rel (0) target = $region29
    $region28: #{tpu_custom_call.1} parent=1 // pred_region
      _
    $region29: #{tpu_custom_call.1} parent=1 // pred_fallthru
      _
    // Predicated region
    $region30: #{tpu_custom_call.1} parent=1 // pred_check
      _
    $region31: #{tpu_custom_call.1} parent=1 // pred_check_branch
      %59 = sbr.rel (0) target = $region33
    $region32: #{tpu_custom_call.1} parent=1 // pred_region
      _
    $region33: #{tpu_custom_call.1} parent=1 // pred_fallthru
      _
    // Predicated region
    $region34: #{tpu_custom_call.1} parent=1 // pred_check
      _
    $region35: #{tpu_custom_call.1} parent=1 // pred_check_branch
      %61 = sbr.rel (0) target = $region37
    $region36: #{tpu_custom_call.1} parent=1 // pred_region
      %62 = dma.done [#allocation3], 128
    $region37: #{tpu_custom_call.1} parent=1 // pred_fallthru
      _
    // Predicated region
    $region38: #{tpu_custom_call.1} parent=1 // pred_check
      _
    $region39: #{tpu_custom_call.1} parent=1 // pred_check_branch
      %64 = sbr.rel (0) target = $region41
    $region40: #{tpu_custom_call.1} parent=1 // pred_region
      %65 = dma.done [#allocation6], 16
    $region41: #{tpu_custom_call.1} parent=1 // pred_fallthru
      _
    // Predicated region
    $region42: #{tpu_custom_call.1} parent=1 // pred_check
      _
    $region43: #{tpu_custom_call.1} parent=1 // pred_check_branch
      %67 = sbr.rel (0) target = $region45
    $region44: #{tpu_custom_call.1} parent=1 // pred_region
      %68 = dma.done [#allocation6], 256
    $region45: #{tpu_custom_call.1} parent=1 // pred_fallthru
      _
    %v70 = vld [vmem:[#allocation2] sm:$0xf]
    %v71 = vld [vmem:[#allocation2 + $0x4] sm:$0xf]
    %v72 = vunpack.c.l.bf16 %v70
    %v73 = vunpack.c.l.bf16 %v71
    %v74 = vmul.f32 %v72, %v72
    %v75 = vmul.f32 %v73, %v73
    %v76 = vld [vmem:[%s1] sm:$0xff]
    %v77 = vld [vmem:[%s1 + $0x8] sm:$0xff]
    %v78 = vld [vmem:[%s1 + $0x10] sm:$0xff]
    %v79 = vld [vmem:[%s1 + $0x18] sm:$0xff]
    %vm80 = vcmask 261120
    %v82 = vsel %vm80, %v74, 0
    %v85 = vsel %vm80, %v75, 0
    %87 = vmatprep.subr.mxu0 0.0
    %88 = vmatpush1.msra.mxu0 %v76
    %89 = vmatprep.subr.mxu0 0.0
    %90 = vmatpush1.msra.mxu0 %v77
    %91 = vmatprep.subr.mxu0 0.0
    %92 = vmatpush1.msra.mxu0 %v78
    %93 = vmatprep.subr.mxu0 0.0
    %94 = vmatpush1.msra.mxu0 %v79
    %95 = vmatprep.subr.mxu0 0.0
    %96 = vmatpush1.msra.mxu0 0.0
    %97 = vmatprep.subr.mxu0 0.0
    %98 = vmatpush1.msra.mxu0 0.0
    %99 = vmatprep.subr.mxu0 0.0
    %100 = vmatpush1.msra.mxu0 0.0
    %101 = vmatprep.subr.mxu0 0.0
    %102 = vmatpush1.msra.mxu0 0.0
    %103 = vmatprep.subr.mxu0 0.0
    %104 = vmatpush1.msra.mxu0 0.0
    %105 = vmatprep.subr.mxu0 0.0
    %106 = vmatpush1.msra.mxu0 0.0
    %107 = vmatprep.subr.mxu0 0.0
    %108 = vmatpush1.msra.mxu0 0.0
    %109 = vmatprep.subr.mxu0 0.0
    %110 = vmatpush1.msra.mxu0 0.0
    %111 = vmatprep.subr.mxu0 0.0
    %112 = vmatpush1.msra.mxu0 0.0
    %113 = vmatprep.subr.mxu0 0.0
    %114 = vmatpush1.msra.mxu0 0.0
    %115 = vmatprep.subr.mxu0 0.0
    %116 = vmatpush1.msra.mxu0 0.0
    %117 = vmatprep.subr.mxu0 0.0
    %118 = vmatpush1.msra.mxu0 0.0
    %119 = vmatprep.subr.mxu0 0.0
    %120 = vmatpush1.msra.mxu0 0.0
    %121 = vmatprep.subr.mxu0 0.0
    %122 = vmatpush1.msra.mxu0 0.0
    %123 = vmatprep.subr.mxu0 0.0
    %124 = vmatpush1.msra.mxu0 0.0
    %125 = vmatprep.subr.mxu0 0.0
    %126 = vmatpush1.msra.mxu0 0.0
    %127 = vmatprep.subr.mxu0 0.0
    %128 = vmatpush1.msra.mxu0 0.0
    %129 = vmatprep.subr.mxu0 0.0
    %130 = vmatpush1.msra.mxu0 0.0
    %131 = vmatprep.subr.mxu0 0.0
    %132 = vmatpush1.msra.mxu0 0.0
    %133 = vmatprep.subr.mxu0 0.0
    %134 = vmatpush1.msra.mxu0 0.0
    %135 = vmatprep.subr.mxu0 0.0
    %136 = vmatpush1.msra.mxu0 0.0
    %137 = vmatprep.subr.mxu0 0.0
    %138 = vmatpush1.msra.mxu0 0.0
    %139 = vmatprep.subr.mxu0 0.0
    %140 = vmatpush1.msra.mxu0 0.0
    %141 = vmatprep.subr.mxu0 0.0
    %142 = vmatpush1.msra.mxu0 0.0
    %143 = vmatprep.subr.mxu0 0.0
    %144 = vmatpush1.msra.mxu0 0.0
    %145 = vmatprep.subr.mxu0 0.0
    %146 = vmatpush1.msra.mxu0 0.0
    %147 = vmatprep.subr.mxu0 0.0
    %148 = vmatpush1.msra.mxu0 0.0
    %149 = vmatprep.subr.mxu0 0.0
    %150 = vmatpush1.msra.mxu0 0.0
    %151 = vmatprep.mubr.f32.mxu0 0.0
    %152 = vmatmul.mubr.f32.gmra.mrb[0].mxu0 %v82
    %v153 = vpop.f32.mrb[0].mxu0
    %v154 = vadd.f32 0.0, %v153
    %v155 = vpop.f32.mrb[0].mxu0
    %156 = vmatprep.mubr.f32.mxu0 0.0
    %157 = vmatmul.mubr.f32.gmra.mrb[0].mxu0 %v85
    %v158 = vpop.f32.mrb[0].mxu0
    %v159 = vadd.f32 0.0, %v158
    %v160 = vpop.f32.mrb[0].mxu0
    %161 = vdwg.mxu0
    %v162 = vrsqrt.pop %v154
    %v163 = vrsqrt.pop %v159
    %v164 = vmul.f32 %v72, %v162
    %v165 = vmul.f32 %v73, %v163
    %v166 = vpack.c.bf16 %v165, %v164
    %v167 = vld [vmem:[%s2] sm:$0xff]
    %v168 = vld [vmem:[%s2 + $0x8] sm:$0xff]
    %v169 = vld [vmem:[%s2 + $0x10] sm:$0xff]
    %v170 = vld [vmem:[%s2 + $0x18] sm:$0xff]
    %v175 = vunpack.c.l.b16 %v167
    %v176 = vunpack.c.h.b16 %v167
    %v177 = vunpack.c.l.b16 %v168
    %v178 = vunpack.c.h.b16 %v168
    %v179 = vunpack.c.l.b16 %v169
    %v180 = vunpack.c.h.b16 %v169
    %v181 = vunpack.c.l.b16 %v170
    %v182 = vunpack.c.h.b16 %v170
    %v183 = vpack.c.b16 %v177, %v175
    %v184 = vpack.c.b16 %v178, %v176
    %v185 = vpack.c.b16 %v181, %v179
    %v186 = vpack.c.b16 %v182, %v180
    %v192 = vsel %vm80, %v166, 0
    %194 = vmatprep.subr.bf16.mxu0 %v184
    %195 = vmatpush1.bf16.msra.mxu0 %v183
    %196 = vmatprep.subr.bf16.mxu0 %v186
    %197 = vmatpush1.bf16.msra.mxu0 %v185
    %198 = vmatprep.subr.bf16.mxu0 0
    %199 = vmatpush1.bf16.msra.mxu0 0
    %200 = vmatprep.subr.bf16.mxu0 0
    %201 = vmatpush1.bf16.msra.mxu0 0
    %202 = vmatprep.subr.bf16.mxu0 0
    %203 = vmatpush1.bf16.msra.mxu0 0
    %204 = vmatprep.subr.bf16.mxu0 0
    %205 = vmatpush1.bf16.msra.mxu0 0
    %206 = vmatprep.subr.bf16.mxu0 0
    %207 = vmatpush1.bf16.msra.mxu0 0
    %208 = vmatprep.subr.bf16.mxu0 0
    %209 = vmatpush1.bf16.msra.mxu0 0
    %210 = vmatprep.subr.bf16.mxu0 0
    %211 = vmatpush1.bf16.msra.mxu0 0
    %212 = vmatprep.subr.bf16.mxu0 0
    %213 = vmatpush1.bf16.msra.mxu0 0
    %214 = vmatprep.subr.bf16.mxu0 0
    %215 = vmatpush1.bf16.msra.mxu0 0
    %216 = vmatprep.subr.bf16.mxu0 0
    %217 = vmatpush1.bf16.msra.mxu0 0
    %218 = vmatprep.subr.bf16.mxu0 0
    %219 = vmatpush1.bf16.msra.mxu0 0
    %220 = vmatprep.subr.bf16.mxu0 0
    %221 = vmatpush1.bf16.msra.mxu0 0
    %222 = vmatprep.subr.bf16.mxu0 0
    %223 = vmatpush1.bf16.msra.mxu0 0
    %224 = vmatprep.subr.bf16.mxu0 0
    %225 = vmatpush1.bf16.msra.mxu0 0
    %226 = vmatprep.mubr.bf16.mxu0 0
    %227 = vmatmul.mubr.bf16.gmra.mrb[0].mxu0 %v192
    %v228 = vpop.f32.mrb[0].mxu0
    %v229 = vadd.f32 0.0, %v228
    %v230 = vpop.f32.mrb[0].mxu0
    %v231 = vadd.f32 0.0, %v230
    %v232 = vpop.f32.mrb[0].mxu0
    %v233 = vadd.f32 0.0, %v232
    %v234 = vpop.f32.mrb[0].mxu0
    %v235 = vadd.f32 0.0, %v234
    %236 = vdwg.mxu0
    %v237 = vmul.f32 %v229, %v231
    %v238 = vmul.f32 %v233, %v235
    %v239 = vpack.c.bf16 %v238, %v237
    %v240 = vld [vmem:[%s4] sm:$0xf]
    %v241 = vld [vmem:[%s4 + $0x4] sm:$0xf]
    %v242 = vld [vmem:[%s4 + $0x8] sm:$0xf]
    %v243 = vld [vmem:[%s4 + $0xc] sm:$0xf]
    %v244 = vld [vmem:[%s4 + $0x10] sm:$0xf]
    %v245 = vld [vmem:[%s4 + $0x14] sm:$0xf]
    %v246 = vld [vmem:[%s4 + $0x18] sm:$0xf]
    %v247 = vld [vmem:[%s4 + $0x1c] sm:$0xf]
    %v248 = vld [vmem:[%s4 + $0x20] sm:$0xf]
    %v249 = vld [vmem:[%s4 + $0x24] sm:$0xf]
    %v250 = vld [vmem:[%s4 + $0x28] sm:$0xf]
    %v251 = vld [vmem:[%s4 + $0x2c] sm:$0xf]
    %v252 = vld [vmem:[%s4 + $0x30] sm:$0xf]
    %v253 = vld [vmem:[%s4 + $0x34] sm:$0xf]
    %v254 = vld [vmem:[%s4 + $0x38] sm:$0xf]
    %v255 = vld [vmem:[%s4 + $0x3c] sm:$0xf]
    %v256 = vld [vmem:[#allocation5] sm:$0x1]
    %v258 = vlaneseq
    %v259 = vshrl.u32 %v258, 7
    %v260 = vsub.s32 0, %v259
    %v261 = vrot.slane %v256, %v260
    %v279 = vunpack.c.l.b16 %v240
    %v280 = vunpack.c.l.b16 %v241
    %v281 = vunpack.c.l.b16 %v242
    %v282 = vunpack.c.l.b16 %v243
    %v283 = vunpack.c.l.b16 %v244
    %v284 = vunpack.c.l.b16 %v245
    %v285 = vunpack.c.l.b16 %v246
    %v286 = vunpack.c.l.b16 %v247
    %v287 = vunpack.c.l.b16 %v248
    %v288 = vunpack.c.l.b16 %v249
    %v289 = vunpack.c.l.b16 %v250
    %v290 = vunpack.c.l.b16 %v251
    %v291 = vunpack.c.l.b16 %v252
    %v292 = vunpack.c.l.b16 %v253
    %v293 = vunpack.c.l.b16 %v254
    %v294 = vunpack.c.l.b16 %v255
    %v295 = vpack.c.b16 %v280, %v279
    %v296 = vpack.c.b16 %v282, %v281
    %v297 = vpack.c.b16 %v284, %v283
    %v298 = vpack.c.b16 %v286, %v285
    %v299 = vpack.c.b16 %v288, %v287
    %v300 = vpack.c.b16 %v290, %v289
    %v301 = vpack.c.b16 %v292, %v291
    %v302 = vpack.c.b16 %v294, %v293
    %311 = vmatprep.subr.bf16.mxu0 0
    %312 = vmatpush1.bf16.msra.mxu0 %v295
    %313 = vmatprep.subr.bf16.mxu0 0
    %314 = vmatpush1.bf16.msra.mxu0 %v296
    %315 = vmatprep.subr.bf16.mxu0 0
    %316 = vmatpush1.bf16.msra.mxu0 %v297
    %317 = vmatprep.subr.bf16.mxu0 0
    %318 = vmatpush1.bf16.msra.mxu0 %v298
    %319 = vmatprep.subr.bf16.mxu0 0
    %320 = vmatpush1.bf16.msra.mxu0 %v299
    %321 = vmatprep.subr.bf16.mxu0 0
    %322 = vmatpush1.bf16.msra.mxu0 %v300
    %323 = vmatprep.subr.bf16.mxu0 0
    %324 = vmatpush1.bf16.msra.mxu0 %v301
    %325 = vmatprep.subr.bf16.mxu0 0
    %326 = vmatpush1.bf16.msra.mxu0 %v302
    %327 = vmatprep.subr.bf16.mxu0 0
    %328 = vmatpush1.bf16.msra.mxu0 0
    %329 = vmatprep.subr.bf16.mxu0 0
    %330 = vmatpush1.bf16.msra.mxu0 0
    %331 = vmatprep.subr.bf16.mxu0 0
    %332 = vmatpush1.bf16.msra.mxu0 0
    %333 = vmatprep.subr.bf16.mxu0 0
    %334 = vmatpush1.bf16.msra.mxu0 0
    %335 = vmatprep.subr.bf16.mxu0 0
    %336 = vmatpush1.bf16.msra.mxu0 0
    %337 = vmatprep.subr.bf16.mxu0 0
    %338 = vmatpush1.bf16.msra.mxu0 0
    %339 = vmatprep.subr.bf16.mxu0 0
    %340 = vmatpush1.bf16.msra.mxu0 0
    %341 = vmatprep.subr.bf16.mxu0 0
    %342 = vmatpush1.bf16.msra.mxu0 0
    %343 = vmatprep.mubr.bf16.mxu0 0
    %344 = vmatmul.mubr.bf16.gmra.mrb[0].mxu0 %v239
    %v345 = vpop.f32.mrb[0].mxu0
    %v346 = vadd.f32 %v261, %v345
    %v347 = vpop.f32.mrb[0].mxu0
    %v348 = vpop.f32.mrb[0].mxu0
    %v349 = vadd.f32 %v261, %v348
    %v350 = vpop.f32.mrb[0].mxu0
    %351 = vdwg.mxu0
    %v352 = vmax.f32 %v346, 0.0
    %v353 = vmax.f32 %v349, 0.0
    %v354 = vld [vmem:[#allocation7] sm:$0xf]
    %v355 = vld [vmem:[#allocation7 + $0x4] sm:$0xf]
    %v356 = vld [vmem:[#allocation7 + $0x8] sm:$0xf]
    %v357 = vld [vmem:[#allocation7 + $0xc] sm:$0xf]
    %v360 = vunpack.c.l.b16 %v70
    %v361 = vunpack.c.l.b16 %v71
    %v362 = vpack.c.b16 %v361, %v360
    %v367 = vunpack.c.l.b16 %v354
    %v368 = vunpack.c.l.b16 %v355
    %v369 = vunpack.c.l.b16 %v356
    %v370 = vunpack.c.l.b16 %v357
    %v371 = vpack.c.b16 %v368, %v367
    %v372 = vpack.c.b16 %v370, %v369
    %v376 = vsel %vm80, %v362, 0
    %378 = vmatprep.subr.bf16.mxu0 0
    %379 = vmatpush1.bf16.msra.mxu0 %v371
    %380 = vmatprep.subr.bf16.mxu0 0
    %381 = vmatpush1.bf16.msra.mxu0 %v372
    %382 = vmatprep.subr.bf16.mxu0 0
    %383 = vmatpush1.bf16.msra.mxu0 0
    %384 = vmatprep.subr.bf16.mxu0 0
    %385 = vmatpush1.bf16.msra.mxu0 0
    %386 = vmatprep.subr.bf16.mxu0 0
    %387 = vmatpush1.bf16.msra.mxu0 0
    %388 = vmatprep.subr.bf16.mxu0 0
    %389 = vmatpush1.bf16.msra.mxu0 0
    %390 = vmatprep.subr.bf16.mxu0 0
    %391 = vmatpush1.bf16.msra.mxu0 0
    %392 = vmatprep.subr.bf16.mxu0 0
    %393 = vmatpush1.bf16.msra.mxu0 0
    %394 = vmatprep.subr.bf16.mxu0 0
    %395 = vmatpush1.bf16.msra.mxu0 0
    %396 = vmatprep.subr.bf16.mxu0 0
    %397 = vmatpush1.bf16.msra.mxu0 0
    %398 = vmatprep.subr.bf16.mxu0 0
    %399 = vmatpush1.bf16.msra.mxu0 0
    %400 = vmatprep.subr.bf16.mxu0 0
    %401 = vmatpush1.bf16.msra.mxu0 0
    %402 = vmatprep.subr.bf16.mxu0 0
    %403 = vmatpush1.bf16.msra.mxu0 0
    %404 = vmatprep.subr.bf16.mxu0 0
    %405 = vmatpush1.bf16.msra.mxu0 0
    %406 = vmatprep.subr.bf16.mxu0 0
    %407 = vmatpush1.bf16.msra.mxu0 0
    %408 = vmatprep.subr.bf16.mxu0 0
    %409 = vmatpush1.bf16.msra.mxu0 0
    %410 = vmatprep.mubr.bf16.mxu0 0
    %411 = vmatmul.mubr.bf16.gmra.mrb[0].mxu0 %v376
    %v412 = vpop.f32.mrb[0].mxu0
    %v413 = vadd.f32 %v352, %v412
    %v414 = vpop.f32.mrb[0].mxu0
    %v415 = vpop.f32.mrb[0].mxu0
    %v416 = vadd.f32 %v353, %v415
    %v417 = vpop.f32.mrb[0].mxu0
    %418 = vdwg.mxu0
    %v419 = vpack.c.bf16 %v416, %v413
    %v420 = vld [vmem:[%s6] sm:$0xff]
    %v421 = vld [vmem:[%s6 + $0x8] sm:$0xff]
    %v422 = vld [vmem:[%s6 + $0x10] sm:$0xff]
    %v423 = vld [vmem:[%s6 + $0x18] sm:$0xff]
    %v424 = vld [vmem:[%s7] sm:$0x3]
    %v426 = vlaneseq
    %v427 = vshrl.u32 %v426, 7
    %v428 = vsub.s32 0, %v427
    %v429 = vrot.slane %v424, %v428
    %v430 = vlaneseq
    %v431 = vshrl.u32 %v430, 7
    %v432 = vsub.s32 1, %v431
    %v433 = vrot.slane %v424, %v432
    %v440 = vunpack.c.l.b16 %v420
    %v441 = vunpack.c.h.b16 %v420
    %v442 = vunpack.c.l.b16 %v421
    %v443 = vunpack.c.h.b16 %v421
    %v444 = vunpack.c.l.b16 %v422
    %v445 = vunpack.c.h.b16 %v422
    %v446 = vunpack.c.l.b16 %v423
    %v447 = vunpack.c.h.b16 %v423
    %v448 = vpack.c.b16 %v442, %v440
    %v449 = vpack.c.b16 %v443, %v441
    %v450 = vpack.c.b16 %v446, %v444
    %v451 = vpack.c.b16 %v447, %v445
    %v457 = vsel %vm80, %v419, 0
    %459 = vmatprep.subr.bf16.mxu0 %v449
    %460 = vmatpush1.bf16.msra.mxu0 %v448
    %461 = vmatprep.subr.bf16.mxu0 %v451
    %462 = vmatpush1.bf16.msra.mxu0 %v450
    %463 = vmatprep.subr.bf16.mxu0 0
    %464 = vmatpush1.bf16.msra.mxu0 0
    %465 = vmatprep.subr.bf16.mxu0 0
    %466 = vmatpush1.bf16.msra.mxu0 0
    %467 = vmatprep.subr.bf16.mxu0 0
    %468 = vmatpush1.bf16.msra.mxu0 0
    %469 = vmatprep.subr.bf16.mxu0 0
    %470 = vmatpush1.bf16.msra.mxu0 0
    %471 = vmatprep.subr.bf16.mxu0 0
    %472 = vmatpush1.bf16.msra.mxu0 0
    %473 = vmatprep.subr.bf16.mxu0 0
    %474 = vmatpush1.bf16.msra.mxu0 0
    %475 = vmatprep.subr.bf16.mxu0 0
    %476 = vmatpush1.bf16.msra.mxu0 0
    %477 = vmatprep.subr.bf16.mxu0 0
    %478 = vmatpush1.bf16.msra.mxu0 0
    %479 = vmatprep.subr.bf16.mxu0 0
    %480 = vmatpush1.bf16.msra.mxu0 0
    %481 = vmatprep.subr.bf16.mxu0 0
    %482 = vmatpush1.bf16.msra.mxu0 0
    %483 = vmatprep.subr.bf16.mxu0 0
    %484 = vmatpush1.bf16.msra.mxu0 0
    %485 = vmatprep.subr.bf16.mxu0 0
    %486 = vmatpush1.bf16.msra.mxu0 0
    %487 = vmatprep.subr.bf16.mxu0 0
    %488 = vmatpush1.bf16.msra.mxu0 0
    %489 = vmatprep.subr.bf16.mxu0 0
    %490 = vmatpush1.bf16.msra.mxu0 0
    %491 = vmatprep.mubr.bf16.mxu0 0
    %492 = vmatmul.mubr.bf16.gmra.mrb[0].mxu0 %v457
    %v493 = vpop.f32.mrb[0].mxu0
    %v494 = vadd.f32 %v429, %v493
    %v495 = vpop.f32.mrb[0].mxu0
    %v496 = vadd.f32 %v433, %v495
    %v497 = vpop.f32.mrb[0].mxu0
    %v498 = vadd.f32 %v429, %v497
    %v499 = vpop.f32.mrb[0].mxu0
    %v500 = vadd.f32 %v433, %v499
    %501 = vdwg.mxu0
    %502 = vst [vmem:[#allocation8] sm:$0xff] %v494
    %503 = vst [vmem:[#allocation8 + $0x8] sm:$0xff] %v496
    %504 = vst [vmem:[#allocation8 + $0x10] sm:$0xff] %v498
    %505 = vst [vmem:[#allocation8 + $0x18] sm:$0xff] %v500
    // Predicated region
    $region46: #{tpu_custom_call.1} parent=1 // pred_check
      _
    $region47: #{tpu_custom_call.1} parent=1 // pred_check_branch
      %507 = sbr.rel (0) target = $region49
    $region48: #{tpu_custom_call.1} parent=1 // pred_region
      %s509 = ssub.s32 512, 512
      %510 = vsyncadd [#allocation4], %s509
      %s511 = sshll.u32 [#allocation8], 4
      %s512 = int_to_ptr.vmem [resolvable:$true] %s511
      %517 = dma.vmem_to_hbm [thread:$0]  %s512, 512, %s8, [#allocation4], 256, 256, 16
    $region49: #{tpu_custom_call.1} parent=1 // pred_fallthru
      _
    // Predicated region
    $region50: #{tpu_custom_call.1} parent=1 // pred_check
      _
    $region51: #{tpu_custom_call.1} parent=1 // pred_check_branch
      %519 = sbr.rel (0) target = $region53
    $region52: #{tpu_custom_call.1} parent=1 // pred_region
      %520 = dma.done [#allocation4], 512
    $region53: #{tpu_custom_call.1} parent=1 // pred_fallthru
      _
    %521 = vsyncpa [#allocation3], 1
    %522 = vsyncpa [#allocation6], 1
    %523 = vsyncpa [#allocation4], 1

</llo_original>
